<compile_context>
chip_gen: v7x
topology: tpu7x:2x2x1
jax: 0.10.0
libtpu: 0.0.40
codegen_flags: <defaults>
</compile_context>

<pallas_src>
import jax
import jax.numpy as jnp
from jax.experimental import pallas as pl
from jax.experimental.pallas import tpu as pltpu


def _round_up(x, m):
    return (x + m - 1) // m * m


def _cdiv(a, b):
    return (a + b - 1) // b


# ---------------------------------------------------------------------------
# Pallas kernel: per-token scoring MLP  (fc0 -> GELU -> fc1 -> GELU -> fc3)
# ---------------------------------------------------------------------------
def _score_kernel(x_ref, w0_ref, b0_ref, w1_ref, b1_ref, w3_ref, out_ref):
    # x_ref: (TM, D) f32 token slab. Cast to bf16 in-kernel (VPU) so HBM only
    # ever carries the original f32 activations (no host-side cast/pad pass).
    x = x_ref[...].astype(jnp.bfloat16)

    # fc0 -> GELU : bf16 MXU matmul, f32 accumulate, f32 activation.
    h = jnp.dot(x, w0_ref[...], preferred_element_type=jnp.float32)      # (TM, D)
    h = h + b0_ref[...]
    h = jax.nn.gelu(h, approximate=True)        # tanh approx -> EUP slot

    # fc1 -> GELU (Dq zero-padded to a 128-lane multiple in the wrapper).
    h = jnp.dot(h.astype(jnp.bfloat16), w1_ref[...],
                preferred_element_type=jnp.float32)                       # (TM, Dq)
    h = h + b1_ref[...]
    h = jax.nn.gelu(h, approximate=True)

    # fc3 (Dq -> 1), computed as w3 @ h^T so the per-token logits land as a
    # lane-dense (1, TM) row: full-lane unmasked stores, no 1-column MXU pass.
    s = jax.lax.dot_general(
        w3_ref[...], h.astype(jnp.bfloat16),
        dimension_numbers=(((1,), (1,)), ((), ())),
        preferred_element_type=jnp.float32)                               # (1, TM)
    out_ref[0] = s


# ---------------------------------------------------------------------------
# Plain-XLA reference / small-input fallback (f32, exact-erf GELU).
# ---------------------------------------------------------------------------
def _score_logits_jnp(x_flat, params):
    w0t, b0, w1t, b1, w3, b3 = params
    h = jax.nn.gelu(x_flat @ w0t + b0, approximate=False)
    h = jax.nn.gelu(h @ w1t + b1, approximate=False)
    return (h @ w3.T + b3)[:, 0]


def _choose_tm(total, tm_target):
    # Token rows per grid step: a multiple of 128 (v5e MXU rows, lane/sublane
    # friendly everywhere), big enough to amortize the ~0.35us per-step
    # pipeline overhead, but capped near total/2 so there are >= 2 grid blocks
    # to feed both v7x TensorCores.
    half = _round_up(_cdiv(total, 2), 128)
    return max(128, min(tm_target, half))


def mlp_purification_scores(x, params, *, tm_target=512, min_pallas_tokens=256):
    """Returns softmax(scoring-MLP(x)) over the token axis, shape (N, L)."""
    N, L, D = x.shape
    w0t, b0, w1t, b1, w3, b3 = params
    Dq = w1t.shape[1]
    total = N * L

    # Tiny-input / narrow-lane fallback: the whole MLP is nanoseconds of math;
    # the pallas launch + DMA setup would be pure overhead.
    if total < min_pallas_tokens or D < 128:
        logits = _score_logits_jnp(x.reshape(total, D), params).reshape(N, L)
        return jax.nn.softmax(logits, axis=-1)

    # Zero-pad the Dq (= D // 4) axis up to a full 128-lane multiple. Exact:
    # padded b1 entries are 0 -> gelu(0) = 0 -> multiplied by padded w3 = 0.
    Dq_pad = _round_up(Dq, 128)
    if Dq_pad != Dq:
        w1t = jnp.pad(w1t, ((0, 0), (0, Dq_pad - Dq)))
        b1 = jnp.pad(b1, ((0, 0), (0, Dq_pad - Dq)))
        w3 = jnp.pad(w3, ((0, 0), (0, Dq_pad - Dq)))

    TM = _choose_tm(total, tm_target)
    nblocks = _cdiv(total, TM)

    x_flat = x.reshape(total, D)          # free metadata reshape, stays f32

    def _resident(shape):
        # Constant-index operand: single-buffer it. Double-buffering something
        # that never changes just doubles its VMEM footprint (worst on v7x).
        return pl.BlockSpec(shape, lambda i: (0, 0),
                            pipeline_mode=pl.Buffered(1))

    logits = pl.pallas_call(
        _score_kernel,
        out_shape=jax.ShapeDtypeStruct((nblocks, 1, TM), jnp.float32),
        grid_spec=pltpu.PrefetchScalarGridSpec(
            num_scalar_prefetch=0,
            grid=(nblocks,),
            in_specs=[
                pl.BlockSpec((TM, D), lambda i: (i, 0)),   # x token slab (f32)
                _resident((D, D)),                         # W0^T  (bf16)
                _resident((1, D)),                         # b0    (f32)
                _resident((D, Dq_pad)),                    # W1^T  (bf16)
                _resident((1, Dq_pad)),                    # b1    (f32)
                _resident((1, Dq_pad)),                    # w3    (bf16)
            ],
            out_specs=pl.BlockSpec((1, 1, TM), lambda i: (i, 0, 0)),
        ),
        compiler_params=pltpu.CompilerParams(
            dimension_semantics=("parallel",),
            # Above v5e/v6e's 16/32 MiB scoped defaults, under v7x's 64 MiB
            # physical VMEM. Re-derive TM / this budget for very large D.
            vmem_limit_bytes=48 * 1024 * 1024,
        ),
    )(x_flat,
      w0t.astype(jnp.bfloat16), b0.astype(jnp.float32),
      w1t.astype(jnp.bfloat16), b1.astype(jnp.float32),
      w3.astype(jnp.bfloat16))

    # Ragged tail rows of the last block are garbage by construction; slice
    # them off before the softmax / argsort.
    logits = logits.reshape(nblocks * TM)[:total].reshape(N, L)
    logits = logits + b3                  # fc3 bias (softmax-invariant shift)
    return jax.nn.softmax(logits, axis=-1)


def mlp_purification_forward(x, position_embedding, params,
                             purification_ratio=0.5, pure_ways="atten"):
    """Forward pass of MLP_Purification (pure_ways='atten' path)."""
    N, L, D = x.shape
    len_keep = int(L * purification_ratio)

    if pure_ways not in ("atten", "random", "combine"):
        raise ValueError(f"{pure_ways} not support")
    if pure_ways != "atten":
        # TODO(synk): 'random' / 'combine' paths depend on torch.rand shuffling; only 'atten' implemented.
        raise NotImplementedError("only pure_ways='atten' is implemented")

    scores = mlp_purification_scores(x, params)          # (N, L), softmax over L
    ids_sorted = jnp.argsort(-scores, axis=1)            # descending attention order
    ids_keep = ids_sorted[:, :len_keep]                  # (N, len_keep)

    idx_x = jnp.broadcast_to(ids_keep[:, :, None], (N, len_keep, D))
    x_selected = jnp.take_along_axis(x, idx_x, axis=1)

    P = position_embedding.shape[-1]
    idx_p = jnp.broadcast_to(ids_keep[:, :, None], (N, len_keep, P))
    pos_selected = jnp.take_along_axis(position_embedding, idx_p, axis=1)

    return x_selected, pos_selected


def init_params(key, in_dim):
    """Deterministic init mimicking nn.Linear defaults (uniform +/- 1/sqrt(fan_in))."""
    assert in_dim % 4 == 0, "in_dim must be divisible by 4 (fc1 uses in_dim // 4)"
    ks = jax.random.split(key, 6)
    b_in = 1.0 / jnp.sqrt(jnp.float32(in_dim))
    b_q = 1.0 / jnp.sqrt(jnp.float32(in_dim // 4))

    W0 = jax.random.uniform(ks[0], (in_dim, in_dim), jnp.float32, -b_in, b_in)
    b0 = jax.random.uniform(ks[1], (1, in_dim), jnp.float32, -b_in, b_in)
    W1 = jax.random.uniform(ks[2], (in_dim // 4, in_dim), jnp.float32, -b_in, b_in)
    b1 = jax.random.uniform(ks[3], (1, in_dim // 4), jnp.float32, -b_in, b_in)
    W3 = jax.random.uniform(ks[4], (1, in_dim // 4), jnp.float32, -b_q, b_q)
    b3 = jax.random.uniform(ks[5], (1, 1), jnp.float32, -b_q, b_q)

    # fc0/fc1 weights are passed transposed (in, out) so the kernel does x @ Wt
    # directly; fc3 is passed as its natural (1, in_dim//4) row.
    return (W0.T, b0, W1.T, b1, W3, b3)


if __name__ == "__main__":
    # Kernel-path shapes: total = 256 tokens, D = 128 -> full 128-lane tiles,
    # 2 grid blocks of TM = 128 rows.
    N, L, D, P = 2, 128, 128, 64
    key = jax.random.PRNGKey(0)
    k_x, k_pos, k_params = jax.random.split(key, 3)

    x = jax.random.normal(k_x, (N, L, D), dtype=jnp.float32)
    pos_emb = jax.random.normal(k_pos, (N, L, P), dtype=jnp.float32)
    params = init_params(k_params, D)

    # Run the Pallas scoring kernel and check against the f32 exact-GELU ref.
    scores = mlp_purification_scores(x, params)
    ref_logits = _score_logits_jnp(x.reshape(N * L, D), params).reshape(N, L)
    ref_scores = jax.nn.softmax(ref_logits, axis=-1)
    jax.block_until_ready((scores, ref_scores))
    max_err = float(jnp.max(jnp.abs(scores - ref_scores)))
    assert max_err < 1e-2, f"score mismatch vs f32 reference: {max_err}"

    x_sel, pos_sel = mlp_purification_forward(
        x, pos_emb, params, purification_ratio=0.5, pure_ways="atten")
    jax.block_until_ready((x_sel, pos_sel))
    len_keep = int(L * 0.5)
    assert x_sel.shape == (N, len_keep, D)
    assert pos_sel.shape == (N, len_keep, P)

    # Tiny-shape fallback path (plain XLA; pallas would be pure overhead).
    x_s = jax.random.normal(k_x, (2, 8, 32), dtype=jnp.float32)
    pos_s = jax.random.normal(k_pos, (2, 8, 16), dtype=jnp.float32)
    params_s = init_params(k_params, 32)
    xs_sel, ps_sel = mlp_purification_forward(
        x_s, pos_s, params_s, purification_ratio=0.5, pure_ways="atten")
    jax.block_until_ready((xs_sel, ps_sel))
    assert xs_sel.shape == (2, 4, 32) and ps_sel.shape == (2, 4, 16)

    print("KERNEL_OK")
</pallas_src>

<mosaic_0001>
module attributes {stable_mosaic.version = 11 : i64} {
  func.func @_score_kernel(%arg0: i32, %arg1: memref<128x128xf32, #tpu.memory_space<vmem>>, %arg2: memref<128x128xbf16, #tpu.memory_space<vmem>>, %arg3: memref<1x128xf32, #tpu.memory_space<vmem>>, %arg4: memref<128x128xbf16, #tpu.memory_space<vmem>>, %arg5: memref<1x128xf32, #tpu.memory_space<vmem>>, %arg6: memref<1x128xbf16, #tpu.memory_space<vmem>>, %arg7: memref<1x1x128xf32, #tpu.memory_space<vmem>>) attributes {dimension_semantics = [#tpu.dimension_semantics<parallel>], iteration_bounds = array<i64: 2>, scalar_prefetch = 0 : i64, scratch_operands = 0 : i64, tpu.core_type = #tpu.core_type<tc>, window_params = [{transform_indices = @transform_0, window_bounds = array<i64: 128, 128>}, {pipeline_mode = #tpu.pipeline_mode<synchronous>, transform_indices = @transform_1, window_bounds = array<i64: 128, 128>}, {pipeline_mode = #tpu.pipeline_mode<synchronous>, transform_indices = @transform_2, window_bounds = array<i64: 1, 128>}, {pipeline_mode = #tpu.pipeline_mode<synchronous>, transform_indices = @transform_3, window_bounds = array<i64: 128, 128>}, {pipeline_mode = #tpu.pipeline_mode<synchronous>, transform_indices = @transform_4, window_bounds = array<i64: 1, 128>}, {pipeline_mode = #tpu.pipeline_mode<synchronous>, transform_indices = @transform_5, window_bounds = array<i64: 1, 128>}, {transform_indices = @transform_6, window_bounds = array<i64: 1, 1, 128>}]} {
    %c0 = arith.constant 0 : index
    %c0_0 = arith.constant 0 : index
    %0 = vector.load %arg1[%c0, %c0_0] : memref<128x128xf32, #tpu.memory_space<vmem>>, vector<128x128xf32>
    %1 = arith.truncf %0 : vector<128x128xf32> to vector<128x128xbf16>
    %c0_1 = arith.constant 0 : index
    %c0_2 = arith.constant 0 : index
    %2 = vector.load %arg2[%c0_1, %c0_2] : memref<128x128xbf16, #tpu.memory_space<vmem>>, vector<128x128xbf16>
    %cst = arith.constant dense<0.000000e+00> : vector<128x128xf32>
    %3 = tpu.matmul %1, %2, %cst {dimension_numbers = #tpu.dot_dimension_numbers<[1], [0], [0], [1], [0, 0, 1, 1], [], []>} : vector<128x128xbf16>, vector<128x128xbf16>, vector<128x128xf32> -> vector<128x128xf32>
    %c0_3 = arith.constant 0 : index
    %c0_4 = arith.constant 0 : index
    %4 = vector.load %arg3[%c0_3, %c0_4] : memref<1x128xf32, #tpu.memory_space<vmem>>, vector<1x128xf32>
    %5 = vector.broadcast %4 : vector<1x128xf32> to vector<128x128xf32>
    %6 = arith.addf %3, %5 : vector<128x128xf32>
    %7 = arith.mulf %6, %6 : vector<128x128xf32>
    %8 = arith.mulf %6, %7 : vector<128x128xf32>
    %cst_5 = arith.constant 4.471500e-02 : f32
    %9 = vector.broadcast %cst_5 : f32 to vector<128x128xf32>
    %10 = arith.mulf %9, %8 : vector<128x128xf32>
    %11 = arith.addf %6, %10 : vector<128x128xf32>
    %cst_6 = arith.constant 0.797884583 : f32
    %12 = vector.broadcast %cst_6 : f32 to vector<128x128xf32>
    %13 = arith.mulf %12, %11 : vector<128x128xf32>
    %14 = math.tanh %13 : vector<128x128xf32>
    %cst_7 = arith.constant 1.000000e+00 : f32
    %15 = vector.broadcast %cst_7 : f32 to vector<128x128xf32>
    %16 = arith.addf %15, %14 : vector<128x128xf32>
    %cst_8 = arith.constant 5.000000e-01 : f32
    %17 = vector.broadcast %cst_8 : f32 to vector<128x128xf32>
    %18 = arith.mulf %17, %16 : vector<128x128xf32>
    %19 = arith.mulf %6, %18 : vector<128x128xf32>
    %20 = arith.truncf %19 : vector<128x128xf32> to vector<128x128xbf16>
    %c0_9 = arith.constant 0 : index
    %c0_10 = arith.constant 0 : index
    %21 = vector.load %arg4[%c0_9, %c0_10] : memref<128x128xbf16, #tpu.memory_space<vmem>>, vector<128x128xbf16>
    %cst_11 = arith.constant dense<0.000000e+00> : vector<128x128xf32>
    %22 = tpu.matmul %20, %21, %cst_11 {dimension_numbers = #tpu.dot_dimension_numbers<[1], [0], [0], [1], [0, 0, 1, 1], [], []>} : vector<128x128xbf16>, vector<128x128xbf16>, vector<128x128xf32> -> vector<128x128xf32>
    %c0_12 = arith.constant 0 : index
    %c0_13 = arith.constant 0 : index
    %23 = vector.load %arg5[%c0_12, %c0_13] : memref<1x128xf32, #tpu.memory_space<vmem>>, vector<1x128xf32>
    %24 = vector.broadcast %23 : vector<1x128xf32> to vector<128x128xf32>
    %25 = arith.addf %22, %24 : vector<128x128xf32>
    %26 = arith.mulf %25, %25 : vector<128x128xf32>
    %27 = arith.mulf %25, %26 : vector<128x128xf32>
    %cst_14 = arith.constant 4.471500e-02 : f32
    %28 = vector.broadcast %cst_14 : f32 to vector<128x128xf32>
    %29 = arith.mulf %28, %27 : vector<128x128xf32>
    %30 = arith.addf %25, %29 : vector<128x128xf32>
    %cst_15 = arith.constant 0.797884583 : f32
    %31 = vector.broadcast %cst_15 : f32 to vector<128x128xf32>
    %32 = arith.mulf %31, %30 : vector<128x128xf32>
    %33 = math.tanh %32 : vector<128x128xf32>
    %cst_16 = arith.constant 1.000000e+00 : f32
    %34 = vector.broadcast %cst_16 : f32 to vector<128x128xf32>
    %35 = arith.addf %34, %33 : vector<128x128xf32>
    %cst_17 = arith.constant 5.000000e-01 : f32
    %36 = vector.broadcast %cst_17 : f32 to vector<128x128xf32>
    %37 = arith.mulf %36, %35 : vector<128x128xf32>
    %38 = arith.mulf %25, %37 : vector<128x128xf32>
    %c0_18 = arith.constant 0 : index
    %c0_19 = arith.constant 0 : index
    %39 = vector.load %arg6[%c0_18, %c0_19] : memref<1x128xbf16, #tpu.memory_space<vmem>>, vector<1x128xbf16>
    %40 = arith.truncf %38 : vector<128x128xf32> to vector<128x128xbf16>
    %cst_20 = arith.constant dense<0.000000e+00> : vector<1x128xf32>
    %41 = tpu.matmul %39, %40, %cst_20 {dimension_numbers = #tpu.dot_dimension_numbers<[1], [1], [0], [0], [0, 0, 1, 0], [], []>} : vector<1x128xbf16>, vector<128x128xbf16>, vector<1x128xf32> -> vector<1x128xf32>
    %c0_21 = arith.constant 0 : index
    %c0_22 = arith.constant 0 : index
    %c0_23 = arith.constant 0 : index
    %42 = vector.load %arg7[%c0_21, %c0_22, %c0_23] : memref<1x1x128xf32, #tpu.memory_space<vmem>>, vector<1x1x128xf32>
    %43 = vector.shape_cast %42 : vector<1x1x128xf32> to vector<1x128xf32>
    %44 = vector.shape_cast %41 : vector<1x128xf32> to vector<1x1x128xf32>
    tpu.vector_store %arg7[%c0_21, %c0_22, %c0_23], %44 {strides = array<i32>} : memref<1x1x128xf32, #tpu.memory_space<vmem>>, vector<1x1x128xf32>,
    return
  }
  func.func @transform_0(%arg0: i32) -> (i32, i32) {
    %c0_i32 = arith.constant 0 : i32
    %c0_i32_0 = arith.constant 0 : i32
    return %arg0, %c0_i32 : i32, i32
  }
  func.func @transform_1(%arg0: i32) -> (i32, i32) {
    %c0_i32 = arith.constant 0 : i32
    %c0_i32_0 = arith.constant 0 : i32
    %c0_i32_1 = arith.constant 0 : i32
    return %c0_i32, %c0_i32_0 : i32, i32
  }
  func.func @transform_2(%arg0: i32) -> (i32, i32) {
    %c0_i32 = arith.constant 0 : i32
    %c0_i32_0 = arith.constant 0 : i32
    %c0_i32_1 = arith.constant 0 : i32
    return %c0_i32, %c0_i32_0 : i32, i32
  }
  func.func @transform_3(%arg0: i32) -> (i32, i32) {
    %c0_i32 = arith.constant 0 : i32
    %c0_i32_0 = arith.constant 0 : i32
    %c0_i32_1 = arith.constant 0 : i32
    return %c0_i32, %c0_i32_0 : i32, i32
  }
  func.func @transform_4(%arg0: i32) -> (i32, i32) {
    %c0_i32 = arith.constant 0 : i32
    %c0_i32_0 = arith.constant 0 : i32
    %c0_i32_1 = arith.constant 0 : i32
    return %c0_i32, %c0_i32_0 : i32, i32
  }
  func.func @transform_5(%arg0: i32) -> (i32, i32) {
    %c0_i32 = arith.constant 0 : i32
    %c0_i32_0 = arith.constant 0 : i32
    %c0_i32_1 = arith.constant 0 : i32
    return %c0_i32, %c0_i32_0 : i32, i32
  }
  func.func @transform_6(%arg0: i32) -> (i32, i32, i32) {
    %c0_i32 = arith.constant 0 : i32
    %c0_i32_0 = arith.constant 0 : i32
    %c0_i32_1 = arith.constant 0 : i32
    return %arg0, %c0_i32, %c0_i32_0 : i32, i32, i32
  }
}

</mosaic_0001>

<llo_original>
// kernel: tpu_custom_call.1
$region0: #{tpu_custom_call.1}
  #allocation0 [shape = 'u32[]', space=smem, size = 0x4, offset = 0x4, fixed_abs, tag = 'smem constant byte address 0x4 - core index']
  #allocation1 [shape = 'u32[144,128]{1,0:T(1,128)}', space=vmem, size = 0x12000, scoped, tag = 'internal scratch']
  %s0 = inlined_call_operand.hbm [shape: f32[256,128], index: 0, kind: input, shape index: {}]
  %s1 = inlined_call_operand.hbm [shape: bf16[128,128], index: 1, kind: input, shape index: {}]
  %s2 = inlined_call_operand.vmem [shape: f32[1,128], index: 2, kind: input, shape index: {}]
  %s3 = inlined_call_operand.hbm [shape: bf16[128,128], index: 3, kind: input, shape index: {}]
  %s4 = inlined_call_operand.vmem [shape: f32[1,128], index: 4, kind: input, shape index: {}]
  %s5 = inlined_call_operand.vmem [shape: bf16[1,128], index: 5, kind: input, shape index: {}]
  %s6 = inlined_call_operand.hbm [shape: f32[2,1,128], index: 6, kind: output, shape index: {}]
  %s7 = sld [smem:[#allocation0]]
  $region69: #{tpu_custom_call.1} parent=0
    _
  %s9 = ssub.s32 1, %s7
  %s10 = scalar_select 0, %s9, %s7
  $region1: #{tpu_custom_call.1} parent=0
    #allocation2 [shape = 'u8[131072]{0}', space=vmem, size = 0x20000, scoped, tag = 'input window, operand 0']
    #allocation3 [shape = 's32[2]{0}', space=sflag, size = 0x8, scoped, tag = 'scoped memory for tpu_custom_call.1']
    #allocation4 [shape = 's32[2]{0}', space=sflag, size = 0x8, scoped, tag = 'scoped memory for tpu_custom_call.1']
    #allocation5 [shape = 'u8[32768]{0}', space=vmem, size = 0x8000, scoped, tag = 'input window, operand 1, single buffered']
    #allocation6 [shape = 's32[1]{0}', space=sflag, size = 0x4, scoped, tag = 'scoped memory for tpu_custom_call.1']
    #allocation7 [shape = 'u8[32768]{0}', space=vmem, size = 0x8000, scoped, tag = 'input window, operand 3, single buffered']
    #allocation8 [shape = 'u8[1024]{0}', space=vmem, size = 0x400, scoped, tag = 'output window, operand 0']
    %11 = vsyncpa [#allocation3], 0
    %s12 = scalar_lea.sflag [#allocation3], 1
    %13 = vsyncpa %s12, 0
    %14 = vsyncpa [#allocation6], 0
    %15 = vsyncpa [#allocation4], 0
    %s16 = scalar_lea.sflag [#allocation4], 1
    %17 = vsyncpa %s16, 0
    loop: start=0, step=1, limit=4
    $region2: #{tpu_custom_call.1} parent=1 // loop_pre_header
      _
    $region3: #{tpu_custom_call.1} parent=1 // loop_header
      %s19 = sphi 0, %s23
      %p20 = scmp.ge.s32.totalorder %s19, 4
      %s29 = sphi 0, %s31
      %s32 = sphi 0, %s29
      %s33 = sphi 0, %s32
      %s49 = sphi 0, %s33
      %s53 = sphi 0, %s53
      %s55 = sphi 0, %s53
      %s56 = sphi 0, %s55
      %s70 = sphi 0, %s56
      %s74 = sphi 0, %s74
      %s76 = sphi 0, %s74
      %s77 = sphi 0, %s76
      %s91 = sphi 0, %s77
      %s95 = sphi 0, %s95
      %s97 = sphi 0, %s95
      %s98 = sphi 0, %s97
      %s112 = sphi 0, %s98
      %s116 = sphi 0, %s116
      %s118 = sphi 0, %s116
      %s119 = sphi 0, %s118
      %s133 = sphi 0, %s119
      %s137 = sphi 0, %s137
      %s139 = sphi 0, %s137
      %s140 = sphi 0, %s139
      %s154 = sphi 0, %s140
      %s160 = sphi 0, %s162
      %s163 = sphi 0, %s160
      %s164 = sphi 0, %s163
      %s180 = sphi 0, %s164
    $region4: #{tpu_custom_call.1} parent=1 // loop_header_branch
      %22 = sbr.rel (%p20) target = $region8
    $region5: #{tpu_custom_call.1} parent=1 // loop_body
      %s24 = ssub.s32 %s19, 1
      %s25 = ssub.s32 %s19, 2
      %s26 = sadd.s32 %s19, 1
      %s27 = ssub.s32 %s19, %s26
      %p28 = scmp.eq.s32.totalorder %s27, 0
      %s30 = sadd.s32 %s29, 1
      %s31 = scalar_select %p28, %s29, %s30
      %p34 = pneg %p28
      %p35 = scmp.eq.s32.totalorder %s19, 1
      %p36 = por %p34, %p35
      %p37 = scmp.ne.s32.totalorder %s29, %s32
      %p38 = scmp.eq.s32.totalorder %s19, 0
      %p39 = por %p37, %p38
      %p40 = scmp.ne.s32.totalorder %s29, %s32
      %p41 = scmp.eq.s32.totalorder %s24, 1
      %p42 = por %p40, %p41
      %p43 = scmp.ne.s32.totalorder %s32, %s33
      %p44 = scmp.eq.s32.totalorder %s24, 0
      %p45 = por %p43, %p44
      %p46 = scmp.ne.s32.totalorder %s32, %s33
      %p47 = scmp.eq.s32.totalorder %s25, 1
      %p48 = por %p46, %p47
      %p50 = scmp.ne.s32.totalorder %s33, %s49
      %p51 = scmp.eq.s32.totalorder %s25, 0
      %p52 = por %p50, %p51
      %s54 = sadd.s32 %s53, 1
      %p57 = scmp.eq.s32.totalorder %s19, 1
      %p58 = scmp.ne.s32.totalorder %s53, %s55
      %p59 = scmp.eq.s32.totalorder %s19, 0
      %p60 = por %p58, %p59
      %p61 = scmp.ne.s32.totalorder %s53, %s55
      %p62 = scmp.eq.s32.totalorder %s24, 1
      %p63 = por %p61, %p62
      %p64 = scmp.ne.s32.totalorder %s55, %s56
      %p65 = scmp.eq.s32.totalorder %s24, 0
      %p66 = por %p64, %p65
      %p67 = scmp.ne.s32.totalorder %s55, %s56
      %p68 = scmp.eq.s32.totalorder %s25, 1
      %p69 = por %p67, %p68
      %p71 = scmp.ne.s32.totalorder %s56, %s70
      %p72 = scmp.eq.s32.totalorder %s25, 0
      %p73 = por %p71, %p72
      %s75 = sadd.s32 %s74, 1
      %p78 = scmp.eq.s32.totalorder %s19, 1
      %p79 = scmp.ne.s32.totalorder %s74, %s76
      %p80 = scmp.eq.s32.totalorder %s19, 0
      %p81 = por %p79, %p80
      %p82 = scmp.ne.s32.totalorder %s74, %s76
      %p83 = scmp.eq.s32.totalorder %s24, 1
      %p84 = por %p82, %p83
      %p85 = scmp.ne.s32.totalorder %s76, %s77
      %p86 = scmp.eq.s32.totalorder %s24, 0
      %p87 = por %p85, %p86
      %p88 = scmp.ne.s32.totalorder %s76, %s77
      %p89 = scmp.eq.s32.totalorder %s25, 1
      %p90 = por %p88, %p89
      %p92 = scmp.ne.s32.totalorder %s77, %s91
      %p93 = scmp.eq.s32.totalorder %s25, 0
      %p94 = por %p92, %p93
      %s96 = sadd.s32 %s95, 1
      %p99 = scmp.eq.s32.totalorder %s19, 1
      %p100 = scmp.ne.s32.totalorder %s95, %s97
      %p101 = scmp.eq.s32.totalorder %s19, 0
      %p102 = por %p100, %p101
      %p103 = scmp.ne.s32.totalorder %s95, %s97
      %p104 = scmp.eq.s32.totalorder %s24, 1
      %p105 = por %p103, %p104
      %p106 = scmp.ne.s32.totalorder %s97, %s98
      %p107 = scmp.eq.s32.totalorder %s24, 0
      %p108 = por %p106, %p107
      %p109 = scmp.ne.s32.totalorder %s97, %s98
      %p110 = scmp.eq.s32.totalorder %s25, 1
      %p111 = por %p109, %p110
      %p113 = scmp.ne.s32.totalorder %s98, %s112
      %p114 = scmp.eq.s32.totalorder %s25, 0
      %p115 = por %p113, %p114
      %s117 = sadd.s32 %s116, 1
      %p120 = scmp.eq.s32.totalorder %s19, 1
      %p121 = scmp.ne.s32.totalorder %s116, %s118
      %p122 = scmp.eq.s32.totalorder %s19, 0
      %p123 = por %p121, %p122
      %p124 = scmp.ne.s32.totalorder %s116, %s118
      %p125 = scmp.eq.s32.totalorder %s24, 1
      %p126 = por %p124, %p125
      %p127 = scmp.ne.s32.totalorder %s118, %s119
      %p128 = scmp.eq.s32.totalorder %s24, 0
      %p129 = por %p127, %p128
      %p130 = scmp.ne.s32.totalorder %s118, %s119
      %p131 = scmp.eq.s32.totalorder %s25, 1
      %p132 = por %p130, %p131
      %p134 = scmp.ne.s32.totalorder %s119, %s133
      %p135 = scmp.eq.s32.totalorder %s25, 0
      %p136 = por %p134, %p135
      %s138 = sadd.s32 %s137, 1
      %p141 = scmp.eq.s32.totalorder %s19, 1
      %p142 = scmp.ne.s32.totalorder %s137, %s139
      %p143 = scmp.eq.s32.totalorder %s19, 0
      %p144 = por %p142, %p143
      %p145 = scmp.ne.s32.totalorder %s137, %s139
      %p146 = scmp.eq.s32.totalorder %s24, 1
      %p147 = por %p145, %p146
      %p148 = scmp.ne.s32.totalorder %s139, %s140
      %p149 = scmp.eq.s32.totalorder %s24, 0
      %p150 = por %p148, %p149
      %p151 = scmp.ne.s32.totalorder %s139, %s140
      %p152 = scmp.eq.s32.totalorder %s25, 1
      %p153 = por %p151, %p152
      %p155 = scmp.ne.s32.totalorder %s140, %s154
      %p156 = scmp.eq.s32.totalorder %s25, 0
      %p157 = por %p155, %p156
      %s158 = ssub.s32 %s19, %s26
      %p159 = scmp.eq.s32.totalorder %s158, 0
      %s161 = sadd.s32 %s160, 1
      %s162 = scalar_select %p159, %s160, %s161
      %p165 = pneg %p159
      %p166 = scmp.eq.s32.totalorder %s19, 1
      %p167 = por %p165, %p166
      %p168 = scmp.ne.s32.totalorder %s160, %s163
      %p169 = scmp.eq.s32.totalorder %s19, 0
      %p170 = por %p168, %p169
      %p171 = scmp.ne.s32.totalorder %s160, %s163
      %p172 = scmp.eq.s32.totalorder %s24, 1
      %p173 = por %p171, %p172
      %p174 = scmp.ne.s32.totalorder %s163, %s164
      %p175 = scmp.eq.s32.totalorder %s24, 0
      %p176 = por %p174, %p175
      %p177 = scmp.ne.s32.totalorder %s163, %s164
      %p178 = scmp.eq.s32.totalorder %s25, 1
      %p179 = por %p177, %p178
      %p181 = scmp.ne.s32.totalorder %s164, %s180
      %p182 = scmp.eq.s32.totalorder %s25, 0
      %p183 = por %p181, %p182
      %p184 = scmp.le.s32.totalorder 1, %s19
      %p185 = scmp.lt.s32.totalorder %s19, 3
      %p186 = pnand %p184, %p185
      %p187 = pneg %p186
      // Predicated region
      $region9: #{tpu_custom_call.1} parent=5 // pred_check
        _
      $region10: #{tpu_custom_call.1} parent=5 // pred_check_branch
        %189 = sbr.rel (%p186) target = $region12
      $region11: #{tpu_custom_call.1} parent=5 // pred_region
        %s190 = ssub.s32 %s19, 1
        // Predicated region
        $region13: #{tpu_custom_call.1} parent=11 // pred_check
          %p191 = pneg %p66
        $region14: #{tpu_custom_call.1} parent=11 // pred_check_branch
          %193 = sbr.rel (%p191) target = $region16
        $region15: #{tpu_custom_call.1} parent=11 // pred_region
          %s195 = ssub.s32 1024, 1024
          %196 = vsyncadd [#allocation6], %s195
          %s197 = sshll.u32 [#allocation5], 4
          %s198 = int_to_ptr.vmem [resolvable:$true] %s197
          %203 = dma.hbm_to_vmem [thread:$0]  %s1, 1024, %s198, [#allocation6], 64, 64, 4
        $region16: #{tpu_custom_call.1} parent=11 // pred_fallthru
          _
        // Predicated region
        $region17: #{tpu_custom_call.1} parent=11 // pred_check
          %p204 = pneg %p87
        $region18: #{tpu_custom_call.1} parent=11 // pred_check_branch
          %206 = sbr.rel (%p204) target = $region20
        $region19: #{tpu_custom_call.1} parent=11 // pred_region
          _
        $region20: #{tpu_custom_call.1} parent=11 // pred_fallthru
          _
        // Predicated region
        $region21: #{tpu_custom_call.1} parent=11 // pred_check
          %p207 = pneg %p108
        $region22: #{tpu_custom_call.1} parent=11 // pred_check_branch
          %209 = sbr.rel (%p207) target = $region24
        $region23: #{tpu_custom_call.1} parent=11 // pred_region
          %s211 = ssub.s32 1024, 1024
          %212 = vsyncadd [#allocation6], %s211
          %s213 = sshll.u32 [#allocation7], 4
          %s214 = int_to_ptr.vmem [resolvable:$true] %s213
          %219 = dma.hbm_to_vmem [thread:$0]  %s3, 1024, %s214, [#allocation6], 64, 64, 4
        $region24: #{tpu_custom_call.1} parent=11 // pred_fallthru
          _
        // Predicated region
        $region25: #{tpu_custom_call.1} parent=11 // pred_check
          %p220 = pneg %p129
        $region26: #{tpu_custom_call.1} parent=11 // pred_check_branch
          %222 = sbr.rel (%p220) target = $region28
        $region27: #{tpu_custom_call.1} parent=11 // pred_region
          _
        $region28: #{tpu_custom_call.1} parent=11 // pred_fallthru
          _
        // Predicated region
        $region29: #{tpu_custom_call.1} parent=11 // pred_check
          %p223 = pneg %p150
        $region30: #{tpu_custom_call.1} parent=11 // pred_check_branch
          %225 = sbr.rel (%p223) target = $region32
        $region31: #{tpu_custom_call.1} parent=11 // pred_region
          _
        $region32: #{tpu_custom_call.1} parent=11 // pred_fallthru
          _
      $region12: #{tpu_custom_call.1} parent=5 // pred_fallthru
        _
      %p226 = scmp.lt.s32.totalorder %s19, 2
      // Predicated region
      $region33: #{tpu_custom_call.1} parent=5 // pred_check
        %p227 = pneg %p226
      $region34: #{tpu_custom_call.1} parent=5 // pred_check_branch
        %229 = sbr.rel (%p227) target = $region36
      $region35: #{tpu_custom_call.1} parent=5 // pred_region
        // Predicated region
        $region37: #{tpu_custom_call.1} parent=35 // pred_check
          %p230 = pneg %p39
        $region38: #{tpu_custom_call.1} parent=35 // pred_check_branch
          %232 = sbr.rel (%p230) target = $region40
        $region39: #{tpu_custom_call.1} parent=35 // pred_region
          %s233 = sand.u32 %s29, 1
          %s234 = scalar_lea.sflag [#allocation3], %s233
          %s235 = sand.u32 %s29, 1
          %s236 = smul.addr %s235, 128
          %s237 = scalar_lea.vmem [#allocation2], %s236
          %s238 = smul.u32 16, %s19
          %s240 = ssub.s32 2048, 2048
          %241 = vsyncadd %s234, %s240
          %s242 = smul.addr %s238, 128
          %s243 = scalar_lea.hbm %s0, %s242
          %s244 = sshll.u32 %s237, 4
          %s245 = int_to_ptr.vmem [resolvable:$true] %s244
          %250 = dma.hbm_to_vmem [thread:$0]  %s243, 2048, %s245, %s234, 128, 128, 8
        $region40: #{tpu_custom_call.1} parent=35 // pred_fallthru
          _
      $region36: #{tpu_custom_call.1} parent=5 // pred_fallthru
        _
      %p251 = scmp.le.s32.totalorder 1, %s19
      %p252 = scmp.lt.s32.totalorder %s19, 3
      %p253 = pnand %p251, %p252
      %p254 = pneg %p253
      // Predicated region
      $region41: #{tpu_custom_call.1} parent=5 // pred_check
        _
      $region42: #{tpu_custom_call.1} parent=5 // pred_check_branch
        %256 = sbr.rel (%p253) target = $region44
      $region43: #{tpu_custom_call.1} parent=5 // pred_region
        %s257 = ssub.s32 %s19, 1
        %s258 = sand.u32 %s32, 1
        %s259 = scalar_lea.sflag [#allocation3], %s258
        %s260 = sand.u32 %s32, 1
        %s261 = smul.addr %s260, 128
        %s262 = scalar_lea.vmem [#allocation2], %s261
        // Predicated region
        $region45: #{tpu_custom_call.1} parent=43 // pred_check
          %p263 = pneg %p45
        $region46: #{tpu_custom_call.1} parent=43 // pred_check_branch
          %265 = sbr.rel (%p263) target = $region48
        $region47: #{tpu_custom_call.1} parent=43 // pred_region
          %266 = dma.done %s259, 2048
        $region48: #{tpu_custom_call.1} parent=43 // pred_fallthru
          _
        // Predicated region
        $region49: #{tpu_custom_call.1} parent=43 // pred_check
          %p267 = pneg %p66
        $region50: #{tpu_custom_call.1} parent=43 // pred_check_branch
          %269 = sbr.rel (%p267) target = $region52
        $region51: #{tpu_custom_call.1} parent=43 // pred_region
          %270 = dma.done [#allocation6], 1024
        $region52: #{tpu_custom_call.1} parent=43 // pred_fallthru
          _
        // Predicated region
        $region53: #{tpu_custom_call.1} parent=43 // pred_check
          %p271 = pneg %p108
        $region54: #{tpu_custom_call.1} parent=43 // pred_check_branch
          %273 = sbr.rel (%p271) target = $region56
        $region55: #{tpu_custom_call.1} parent=43 // pred_region
          %274 = dma.done [#allocation6], 1024
        $region56: #{tpu_custom_call.1} parent=43 // pred_fallthru
          _
        %s275 = sand.u32 %s32, 1
        %s276 = scalar_lea.sflag [#allocation3], %s275
        %s277 = sand.u32 %s32, 1
        %s278 = smul.addr %s277, 128
        %s279 = scalar_lea.vmem [#allocation2], %s278
        %p280 = pneg %p45
        %p281 = pneg %p42
        %p282 = pneg %p66
        %p283 = pneg %p63
        %p284 = pneg %p87
        %p285 = pneg %p84
        %p286 = pneg %p108
        %p287 = pneg %p105
        %p288 = pneg %p129
        %p289 = pneg %p126
        %p290 = pneg %p150
        %p291 = pneg %p147
        %p292 = pneg %p176
        %p293 = pneg %p173
        %s294 = sand.u32 %s163, 1
        %s295 = scalar_lea.sflag [#allocation4], %s294
        %s296 = sand.u32 %s163, 1
        %s297 = scalar_lea.vmem [#allocation8], %s296
        %s298 = smul.u32 16, %s24
        %v300 = vld [vmem:[%s262] sm:$0xff]
        %v301 = vld [vmem:[%s262 + $0x8] sm:$0xff]
        %v302 = vld [vmem:[%s262 + $0x10] sm:$0xff]
        %v303 = vld [vmem:[%s262 + $0x18] sm:$0xff]
        %v304 = vld [vmem:[%s262 + $0x20] sm:$0xff]
        %v305 = vld [vmem:[%s262 + $0x28] sm:$0xff]
        %v306 = vld [vmem:[%s262 + $0x30] sm:$0xff]
        %v307 = vld [vmem:[%s262 + $0x38] sm:$0xff]
        %v308 = vld [vmem:[%s262 + $0x40] sm:$0xff]
        %v309 = vld [vmem:[%s262 + $0x48] sm:$0xff]
        %v310 = vld [vmem:[%s262 + $0x50] sm:$0xff]
        %v311 = vld [vmem:[%s262 + $0x58] sm:$0xff]
        %v312 = vld [vmem:[%s262 + $0x60] sm:$0xff]
        %v313 = vld [vmem:[%s262 + $0x68] sm:$0xff]
        %v314 = vld [vmem:[%s262 + $0x70] sm:$0xff]
        %v315 = vld [vmem:[%s262 + $0x78] sm:$0xff]
        %v316 = vpack.c.bf16 %v301, %v300
        %v317 = vpack.c.bf16 %v303, %v302
        %v318 = vpack.c.bf16 %v305, %v304
        %v319 = vpack.c.bf16 %v307, %v306
        %v320 = vpack.c.bf16 %v309, %v308
        %v321 = vpack.c.bf16 %v311, %v310
        %v322 = vpack.c.bf16 %v313, %v312
        %v323 = vpack.c.bf16 %v315, %v314
        %v324 = vld [vmem:[#allocation5] sm:$0xf]
        %v325 = vld [vmem:[#allocation5 + $0x4] sm:$0xf]
        %v326 = vld [vmem:[#allocation5 + $0x8] sm:$0xf]
        %v327 = vld [vmem:[#allocation5 + $0xc] sm:$0xf]
        %v328 = vld [vmem:[#allocation5 + $0x10] sm:$0xf]
        %v329 = vld [vmem:[#allocation5 + $0x14] sm:$0xf]
        %v330 = vld [vmem:[#allocation5 + $0x18] sm:$0xf]
        %v331 = vld [vmem:[#allocation5 + $0x1c] sm:$0xf]
        %v332 = vld [vmem:[#allocation5 + $0x20] sm:$0xf]
        %v333 = vld [vmem:[#allocation5 + $0x24] sm:$0xf]
        %v334 = vld [vmem:[#allocation5 + $0x28] sm:$0xf]
        %v335 = vld [vmem:[#allocation5 + $0x2c] sm:$0xf]
        %v336 = vld [vmem:[#allocation5 + $0x30] sm:$0xf]
        %v337 = vld [vmem:[#allocation5 + $0x34] sm:$0xf]
        %v338 = vld [vmem:[#allocation5 + $0x38] sm:$0xf]
        %v339 = vld [vmem:[#allocation5 + $0x3c] sm:$0xf]
        %v340 = vld [vmem:[%s2] sm:$0x1]
        %v342 = vlaneseq
        %v343 = vshrl.u32 %v342, 7
        %v344 = vsub.s32 0, %v343
        %v345 = vrot.slane %v340, %v344
        %v363 = vunpack.c.l.b16 %v324
        %v364 = vunpack.c.l.b16 %v325
        %v365 = vunpack.c.l.b16 %v326
        %v366 = vunpack.c.l.b16 %v327
        %v367 = vunpack.c.l.b16 %v328
        %v368 = vunpack.c.l.b16 %v329
        %v369 = vunpack.c.l.b16 %v330
        %v370 = vunpack.c.l.b16 %v331
        %v371 = vunpack.c.l.b16 %v332
        %v372 = vunpack.c.l.b16 %v333
        %v373 = vunpack.c.l.b16 %v334
        %v374 = vunpack.c.l.b16 %v335
        %v375 = vunpack.c.l.b16 %v336
        %v376 = vunpack.c.l.b16 %v337
        %v377 = vunpack.c.l.b16 %v338
        %v378 = vunpack.c.l.b16 %v339
        %v379 = vpack.c.b16 %v364, %v363
        %v380 = vpack.c.b16 %v366, %v365
        %v381 = vpack.c.b16 %v368, %v367
        %v382 = vpack.c.b16 %v370, %v369
        %v383 = vpack.c.b16 %v372, %v371
        %v384 = vpack.c.b16 %v374, %v373
        %v385 = vpack.c.b16 %v376, %v375
        %v386 = vpack.c.b16 %v378, %v377
        %395 = vmatprep.subr.bf16.mxu0 0
        %396 = vmatpush1.bf16.msra.mxu0 %v379
        %397 = vmatprep.subr.bf16.mxu0 0
        %398 = vmatpush1.bf16.msra.mxu0 %v380
        %399 = vmatprep.subr.bf16.mxu0 0
        %400 = vmatpush1.bf16.msra.mxu0 %v381
        %401 = vmatprep.subr.bf16.mxu0 0
        %402 = vmatpush1.bf16.msra.mxu0 %v382
        %403 = vmatprep.subr.bf16.mxu0 0
        %404 = vmatpush1.bf16.msra.mxu0 %v383
        %405 = vmatprep.subr.bf16.mxu0 0
        %406 = vmatpush1.bf16.msra.mxu0 %v384
        %407 = vmatprep.subr.bf16.mxu0 0
        %408 = vmatpush1.bf16.msra.mxu0 %v385
        %409 = vmatprep.subr.bf16.mxu0 0
        %410 = vmatpush1.bf16.msra.mxu0 %v386
        %411 = vmatprep.subr.bf16.mxu0 0
        %412 = vmatpush1.bf16.msra.mxu0 0
        %413 = vmatprep.subr.bf16.mxu0 0
        %414 = vmatpush1.bf16.msra.mxu0 0
        %415 = vmatprep.subr.bf16.mxu0 0
        %416 = vmatpush1.bf16.msra.mxu0 0
        %417 = vmatprep.subr.bf16.mxu0 0
        %418 = vmatpush1.bf16.msra.mxu0 0
        %419 = vmatprep.subr.bf16.mxu0 0
        %420 = vmatpush1.bf16.msra.mxu0 0
        %421 = vmatprep.subr.bf16.mxu0 0
        %422 = vmatpush1.bf16.msra.mxu0 0
        %423 = vmatprep.subr.bf16.mxu0 0
        %424 = vmatpush1.bf16.msra.mxu0 0
        %425 = vmatprep.subr.bf16.mxu0 0
        %426 = vmatpush1.bf16.msra.mxu0 0
        %427 = vmatprep.mubr.bf16.mxu0 0
        %428 = vmatmul.mubr.bf16.gmra.mrb[0].mxu0 %v316
        %v429 = vpop.f32.mrb[0].mxu0
        %v430 = vadd.f32 %v345, %v429
        %v431 = vpop.f32.mrb[0].mxu0
        %v432 = vpop.f32.mrb[0].mxu0
        %v433 = vadd.f32 %v345, %v432
        %v434 = vpop.f32.mrb[0].mxu0
        %435 = vmatprep.mubr.bf16.mxu0 0
        %436 = vmatmul.mubr.bf16.gmra.mrb[0].mxu0 %v317
        %v437 = vpop.f32.mrb[0].mxu0
        %v438 = vadd.f32 %v345, %v437
        %v439 = vpop.f32.mrb[0].mxu0
        %v440 = vpop.f32.mrb[0].mxu0
        %v441 = vadd.f32 %v345, %v440
        %v442 = vpop.f32.mrb[0].mxu0
        %443 = vmatprep.mubr.bf16.mxu0 0
        %444 = vmatmul.mubr.bf16.gmra.mrb[0].mxu0 %v318
        %v445 = vpop.f32.mrb[0].mxu0
        %v446 = vadd.f32 %v345, %v445
        %v447 = vpop.f32.mrb[0].mxu0
        %v448 = vpop.f32.mrb[0].mxu0
        %v449 = vadd.f32 %v345, %v448
        %v450 = vpop.f32.mrb[0].mxu0
        %451 = vmatprep.mubr.bf16.mxu0 0
        %452 = vmatmul.mubr.bf16.gmra.mrb[0].mxu0 %v319
        %v453 = vpop.f32.mrb[0].mxu0
        %v454 = vadd.f32 %v345, %v453
        %v455 = vpop.f32.mrb[0].mxu0
        %v456 = vpop.f32.mrb[0].mxu0
        %v457 = vadd.f32 %v345, %v456
        %v458 = vpop.f32.mrb[0].mxu0
        %459 = vmatprep.mubr.bf16.mxu0 0
        %460 = vmatmul.mubr.bf16.gmra.mrb[0].mxu0 %v320
        %v461 = vpop.f32.mrb[0].mxu0
        %v462 = vadd.f32 %v345, %v461
        %v463 = vpop.f32.mrb[0].mxu0
        %v464 = vpop.f32.mrb[0].mxu0
        %v465 = vadd.f32 %v345, %v464
        %v466 = vpop.f32.mrb[0].mxu0
        %467 = vmatprep.mubr.bf16.mxu0 0
        %468 = vmatmul.mubr.bf16.gmra.mrb[0].mxu0 %v321
        %v469 = vpop.f32.mrb[0].mxu0
        %v470 = vadd.f32 %v345, %v469
        %v471 = vpop.f32.mrb[0].mxu0
        %v472 = vpop.f32.mrb[0].mxu0
        %v473 = vadd.f32 %v345, %v472
        %v474 = vpop.f32.mrb[0].mxu0
        %475 = vmatprep.mubr.bf16.mxu0 0
        %476 = vmatmul.mubr.bf16.gmra.mrb[0].mxu0 %v322
        %v477 = vpop.f32.mrb[0].mxu0
        %v478 = vadd.f32 %v345, %v477
        %v479 = vpop.f32.mrb[0].mxu0
        %v480 = vpop.f32.mrb[0].mxu0
        %v481 = vadd.f32 %v345, %v480
        %v482 = vpop.f32.mrb[0].mxu0
        %483 = vmatprep.mubr.bf16.mxu0 0
        %484 = vmatmul.mubr.bf16.gmra.mrb[0].mxu0 %v323
        %v485 = vpop.f32.mrb[0].mxu0
        %v486 = vadd.f32 %v345, %v485
        %v487 = vpop.f32.mrb[0].mxu0
        %v488 = vpop.f32.mrb[0].mxu0
        %v489 = vadd.f32 %v345, %v488
        %v490 = vpop.f32.mrb[0].mxu0
        %491 = vdwg.mxu0
        %v492 = vmul.f32 %v430, %v430
        %v493 = vmul.f32 %v433, %v433
        %v494 = vmul.f32 %v438, %v438
        %v495 = vmul.f32 %v441, %v441
        %v496 = vmul.f32 %v446, %v446
        %v497 = vmul.f32 %v449, %v449
        %v498 = vmul.f32 %v454, %v454
        %v499 = vmul.f32 %v457, %v457
        %v500 = vmul.f32 %v462, %v462
        %v501 = vmul.f32 %v465, %v465
        %v502 = vmul.f32 %v470, %v470
        %v503 = vmul.f32 %v473, %v473
        %v504 = vmul.f32 %v478, %v478
        %v505 = vmul.f32 %v481, %v481
        %v506 = vmul.f32 %v486, %v486
        %v507 = vmul.f32 %v489, %v489
        %v508 = vmul.f32 %v430, %v492
        %v509 = vmul.f32 %v433, %v493
        %v510 = vmul.f32 %v438, %v494
        %v511 = vmul.f32 %v441, %v495
        %v512 = vmul.f32 %v446, %v496
        %v513 = vmul.f32 %v449, %v497
        %v514 = vmul.f32 %v454, %v498
        %v515 = vmul.f32 %v457, %v499
        %v516 = vmul.f32 %v462, %v500
        %v517 = vmul.f32 %v465, %v501
        %v518 = vmul.f32 %v470, %v502
        %v519 = vmul.f32 %v473, %v503
        %v520 = vmul.f32 %v478, %v504
        %v521 = vmul.f32 %v481, %v505
        %v522 = vmul.f32 %v486, %v506
        %v523 = vmul.f32 %v489, %v507
        %v524 = vmul.f32 %v508, 0.044715
        %v525 = vmul.f32 %v509, 0.044715
        %v526 = vmul.f32 %v510, 0.044715
        %v527 = vmul.f32 %v511, 0.044715
        %v528 = vmul.f32 %v512, 0.044715
        %v529 = vmul.f32 %v513, 0.044715
        %v530 = vmul.f32 %v514, 0.044715
        %v531 = vmul.f32 %v515, 0.044715
        %v532 = vmul.f32 %v516, 0.044715
        %v533 = vmul.f32 %v517, 0.044715
        %v534 = vmul.f32 %v518, 0.044715
        %v535 = vmul.f32 %v519, 0.044715
        %v536 = vmul.f32 %v520, 0.044715
        %v537 = vmul.f32 %v521, 0.044715
        %v538 = vmul.f32 %v522, 0.044715
        %v539 = vmul.f32 %v523, 0.044715
        %v540 = vadd.f32 %v430, %v524
        %v541 = vadd.f32 %v433, %v525
        %v542 = vadd.f32 %v438, %v526
        %v543 = vadd.f32 %v441, %v527
        %v544 = vadd.f32 %v446, %v528
        %v545 = vadd.f32 %v449, %v529
        %v546 = vadd.f32 %v454, %v530
        %v547 = vadd.f32 %v457, %v531
        %v548 = vadd.f32 %v462, %v532
        %v549 = vadd.f32 %v465, %v533
        %v550 = vadd.f32 %v470, %v534
        %v551 = vadd.f32 %v473, %v535
        %v552 = vadd.f32 %v478, %v536
        %v553 = vadd.f32 %v481, %v537
        %v554 = vadd.f32 %v486, %v538
        %v555 = vadd.f32 %v489, %v539
        %v556 = vmul.f32 %v540, 0.7978846
        %v557 = vmul.f32 %v541, 0.7978846
        %v558 = vmul.f32 %v542, 0.7978846
        %v559 = vmul.f32 %v543, 0.7978846
        %v560 = vmul.f32 %v544, 0.7978846
        %v561 = vmul.f32 %v545, 0.7978846
        %v562 = vmul.f32 %v546, 0.7978846
        %v563 = vmul.f32 %v547, 0.7978846
        %v564 = vmul.f32 %v548, 0.7978846
        %v565 = vmul.f32 %v549, 0.7978846
        %v566 = vmul.f32 %v550, 0.7978846
        %v567 = vmul.f32 %v551, 0.7978846
        %v568 = vmul.f32 %v552, 0.7978846
        %v569 = vmul.f32 %v553, 0.7978846
        %v570 = vmul.f32 %v554, 0.7978846
        %v571 = vmul.f32 %v555, 0.7978846
        %v572 = vtanh.pop %v556
        %v573 = vtanh.pop %v557
        %v574 = vtanh.pop %v558
        %v575 = vtanh.pop %v559
        %v576 = vtanh.pop %v560
        %v577 = vtanh.pop %v561
        %v578 = vtanh.pop %v562
        %v579 = vtanh.pop %v563
        %v580 = vtanh.pop %v564
        %v581 = vtanh.pop %v565
        %v582 = vtanh.pop %v566
        %v583 = vtanh.pop %v567
        %v584 = vtanh.pop %v568
        %v585 = vtanh.pop %v569
        %v586 = vtanh.pop %v570
        %v587 = vtanh.pop %v571
        %v588 = vadd.f32 %v572, 1.0
        %v589 = vadd.f32 %v573, 1.0
        %v590 = vadd.f32 %v574, 1.0
        %v591 = vadd.f32 %v575, 1.0
        %v592 = vadd.f32 %v576, 1.0
        %v593 = vadd.f32 %v577, 1.0
        %v594 = vadd.f32 %v578, 1.0
        %v595 = vadd.f32 %v579, 1.0
        %v596 = vadd.f32 %v580, 1.0
        %v597 = vadd.f32 %v581, 1.0
        %v598 = vadd.f32 %v582, 1.0
        %v599 = vadd.f32 %v583, 1.0
        %v600 = vadd.f32 %v584, 1.0
        %v601 = vadd.f32 %v585, 1.0
        %v602 = vadd.f32 %v586, 1.0
        %v603 = vadd.f32 %v587, 1.0
        %v604 = vmul.f32 %v588, 0.5
        %v605 = vmul.f32 %v589, 0.5
        %v606 = vmul.f32 %v590, 0.5
        %v607 = vmul.f32 %v591, 0.5
        %v608 = vmul.f32 %v592, 0.5
        %v609 = vmul.f32 %v593, 0.5
        %v610 = vmul.f32 %v594, 0.5
        %v611 = vmul.f32 %v595, 0.5
        %v612 = vmul.f32 %v596, 0.5
        %v613 = vmul.f32 %v597, 0.5
        %v614 = vmul.f32 %v598, 0.5
        %v615 = vmul.f32 %v599, 0.5
        %v616 = vmul.f32 %v600, 0.5
        %v617 = vmul.f32 %v601, 0.5
        %v618 = vmul.f32 %v602, 0.5
        %v619 = vmul.f32 %v603, 0.5
        %v620 = vmul.f32 %v430, %v604
        %v621 = vmul.f32 %v433, %v605
        %v622 = vmul.f32 %v438, %v606
        %v623 = vmul.f32 %v441, %v607
        %v624 = vmul.f32 %v446, %v608
        %v625 = vmul.f32 %v449, %v609
        %v626 = vmul.f32 %v454, %v610
        %v627 = vmul.f32 %v457, %v611
        %v628 = vmul.f32 %v462, %v612
        %v629 = vmul.f32 %v465, %v613
        %v630 = vmul.f32 %v470, %v614
        %v631 = vmul.f32 %v473, %v615
        %v632 = vmul.f32 %v478, %v616
        %v633 = vmul.f32 %v481, %v617
        %v634 = vmul.f32 %v486, %v618
        %v635 = vmul.f32 %v489, %v619
        %v636 = vpack.c.bf16 %v621, %v620
        %v637 = vpack.c.bf16 %v623, %v622
        %v638 = vpack.c.bf16 %v625, %v624
        %v639 = vpack.c.bf16 %v627, %v626
        %v640 = vpack.c.bf16 %v629, %v628
        %v641 = vpack.c.bf16 %v631, %v630
        %v642 = vpack.c.bf16 %v633, %v632
        %v643 = vpack.c.bf16 %v635, %v634
        %v644 = vld [vmem:[#allocation7] sm:$0xf]
        %v645 = vld [vmem:[#allocation7 + $0x4] sm:$0xf]
        %v646 = vld [vmem:[#allocation7 + $0x8] sm:$0xf]
        %v647 = vld [vmem:[#allocation7 + $0xc] sm:$0xf]
        %v648 = vld [vmem:[#allocation7 + $0x10] sm:$0xf]
        %v649 = vld [vmem:[#allocation7 + $0x14] sm:$0xf]
        %v650 = vld [vmem:[#allocation7 + $0x18] sm:$0xf]
        %v651 = vld [vmem:[#allocation7 + $0x1c] sm:$0xf]
        %v652 = vld [vmem:[#allocation7 + $0x20] sm:$0xf]
        %v653 = vld [vmem:[#allocation7 + $0x24] sm:$0xf]
        %v654 = vld [vmem:[#allocation7 + $0x28] sm:$0xf]
        %v655 = vld [vmem:[#allocation7 + $0x2c] sm:$0xf]
        %v656 = vld [vmem:[#allocation7 + $0x30] sm:$0xf]
        %v657 = vld [vmem:[#allocation7 + $0x34] sm:$0xf]
        %v658 = vld [vmem:[#allocation7 + $0x38] sm:$0xf]
        %v659 = vld [vmem:[#allocation7 + $0x3c] sm:$0xf]
        %v660 = vld [vmem:[%s4] sm:$0x1]
        %v662 = vlaneseq
        %v663 = vshrl.u32 %v662, 7
        %v664 = vsub.s32 0, %v663
        %v665 = vrot.slane %v660, %v664
        %v683 = vunpack.c.l.b16 %v644
        %v684 = vunpack.c.l.b16 %v645
        %v685 = vunpack.c.l.b16 %v646
        %v686 = vunpack.c.l.b16 %v647
        %v687 = vunpack.c.l.b16 %v648
        %v688 = vunpack.c.l.b16 %v649
        %v689 = vunpack.c.l.b16 %v650
        %v690 = vunpack.c.l.b16 %v651
        %v691 = vunpack.c.l.b16 %v652
        %v692 = vunpack.c.l.b16 %v653
        %v693 = vunpack.c.l.b16 %v654
        %v694 = vunpack.c.l.b16 %v655
        %v695 = vunpack.c.l.b16 %v656
        %v696 = vunpack.c.l.b16 %v657
        %v697 = vunpack.c.l.b16 %v658
        %v698 = vunpack.c.l.b16 %v659
        %v699 = vpack.c.b16 %v684, %v683
        %v700 = vpack.c.b16 %v686, %v685
        %v701 = vpack.c.b16 %v688, %v687
        %v702 = vpack.c.b16 %v690, %v689
        %v703 = vpack.c.b16 %v692, %v691
        %v704 = vpack.c.b16 %v694, %v693
        %v705 = vpack.c.b16 %v696, %v695
        %v706 = vpack.c.b16 %v698, %v697
        %715 = vmatprep.subr.bf16.mxu0 0
        %716 = vmatpush1.bf16.msra.mxu0 %v699
        %717 = vmatprep.subr.bf16.mxu0 0
        %718 = vmatpush1.bf16.msra.mxu0 %v700
        %719 = vmatprep.subr.bf16.mxu0 0
        %720 = vmatpush1.bf16.msra.mxu0 %v701
        %721 = vmatprep.subr.bf16.mxu0 0
        %722 = vmatpush1.bf16.msra.mxu0 %v702
        %723 = vmatprep.subr.bf16.mxu0 0
        %724 = vmatpush1.bf16.msra.mxu0 %v703
        %725 = vmatprep.subr.bf16.mxu0 0
        %726 = vmatpush1.bf16.msra.mxu0 %v704
        %727 = vmatprep.subr.bf16.mxu0 0
        %728 = vmatpush1.bf16.msra.mxu0 %v705
        %729 = vmatprep.subr.bf16.mxu0 0
        %730 = vmatpush1.bf16.msra.mxu0 %v706
        %731 = vmatprep.subr.bf16.mxu0 0
        %732 = vmatpush1.bf16.msra.mxu0 0
        %733 = vmatprep.subr.bf16.mxu0 0
        %734 = vmatpush1.bf16.msra.mxu0 0
        %735 = vmatprep.subr.bf16.mxu0 0
        %736 = vmatpush1.bf16.msra.mxu0 0
        %737 = vmatprep.subr.bf16.mxu0 0
        %738 = vmatpush1.bf16.msra.mxu0 0
        %739 = vmatprep.subr.bf16.mxu0 0
        %740 = vmatpush1.bf16.msra.mxu0 0
        %741 = vmatprep.subr.bf16.mxu0 0
        %742 = vmatpush1.bf16.msra.mxu0 0
        %743 = vmatprep.subr.bf16.mxu0 0
        %744 = vmatpush1.bf16.msra.mxu0 0
        %745 = vmatprep.subr.bf16.mxu0 0
        %746 = vmatpush1.bf16.msra.mxu0 0
        %747 = vmatprep.mubr.bf16.mxu0 0
        %748 = vmatmul.mubr.bf16.gmra.mrb[0].mxu0 %v636
        %v749 = vpop.f32.mrb[0].mxu0
        %v750 = vadd.f32 %v665, %v749
        %v751 = vpop.f32.mrb[0].mxu0
        %v752 = vpop.f32.mrb[0].mxu0
        %v753 = vadd.f32 %v665, %v752
        %v754 = vpop.f32.mrb[0].mxu0
        %755 = vmatprep.mubr.bf16.mxu0 0
        %756 = vmatmul.mubr.bf16.gmra.mrb[0].mxu0 %v637
        %v757 = vpop.f32.mrb[0].mxu0
        %v758 = vadd.f32 %v665, %v757
        %v759 = vpop.f32.mrb[0].mxu0
        %v760 = vpop.f32.mrb[0].mxu0
        %v761 = vadd.f32 %v665, %v760
        %v762 = vpop.f32.mrb[0].mxu0
        %763 = vmatprep.mubr.bf16.mxu0 0
        %764 = vmatmul.mubr.bf16.gmra.mrb[0].mxu0 %v638
        %v765 = vpop.f32.mrb[0].mxu0
        %v766 = vadd.f32 %v665, %v765
        %v767 = vpop.f32.mrb[0].mxu0
        %v768 = vpop.f32.mrb[0].mxu0
        %v769 = vadd.f32 %v665, %v768
        %v770 = vpop.f32.mrb[0].mxu0
        %771 = vmatprep.mubr.bf16.mxu0 0
        %772 = vmatmul.mubr.bf16.gmra.mrb[0].mxu0 %v639
        %v773 = vpop.f32.mrb[0].mxu0
        %v774 = vadd.f32 %v665, %v773
        %v775 = vpop.f32.mrb[0].mxu0
        %v776 = vpop.f32.mrb[0].mxu0
        %v777 = vadd.f32 %v665, %v776
        %v778 = vpop.f32.mrb[0].mxu0
        %779 = vmatprep.mubr.bf16.mxu0 0
        %780 = vmatmul.mubr.bf16.gmra.mrb[0].mxu0 %v640
        %v781 = vpop.f32.mrb[0].mxu0
        %v782 = vadd.f32 %v665, %v781
        %v783 = vpop.f32.mrb[0].mxu0
        %v784 = vpop.f32.mrb[0].mxu0
        %v785 = vadd.f32 %v665, %v784
        %v786 = vpop.f32.mrb[0].mxu0
        %787 = vmatprep.mubr.bf16.mxu0 0
        %788 = vmatmul.mubr.bf16.gmra.mrb[0].mxu0 %v641
        %v789 = vpop.f32.mrb[0].mxu0
        %v790 = vadd.f32 %v665, %v789
        %v791 = vpop.f32.mrb[0].mxu0
        %v792 = vpop.f32.mrb[0].mxu0
        %v793 = vadd.f32 %v665, %v792
        %v794 = vpop.f32.mrb[0].mxu0
        %795 = vmatprep.mubr.bf16.mxu0 0
        %796 = vmatmul.mubr.bf16.gmra.mrb[0].mxu0 %v642
        %v797 = vpop.f32.mrb[0].mxu0
        %v798 = vadd.f32 %v665, %v797
        %v799 = vpop.f32.mrb[0].mxu0
        %v800 = vpop.f32.mrb[0].mxu0
        %v801 = vadd.f32 %v665, %v800
        %v802 = vpop.f32.mrb[0].mxu0
        %803 = vmatprep.mubr.bf16.mxu0 0
        %804 = vmatmul.mubr.bf16.gmra.mrb[0].mxu0 %v643
        %v805 = vpop.f32.mrb[0].mxu0
        %v806 = vadd.f32 %v665, %v805
        %v807 = vpop.f32.mrb[0].mxu0
        %v808 = vpop.f32.mrb[0].mxu0
        %v809 = vadd.f32 %v665, %v808
        %v810 = vpop.f32.mrb[0].mxu0
        %811 = vdwg.mxu0
        %v812 = vmul.f32 %v750, %v750
        %v813 = vmul.f32 %v753, %v753
        %v814 = vmul.f32 %v758, %v758
        %v815 = vmul.f32 %v761, %v761
        %v816 = vmul.f32 %v766, %v766
        %v817 = vmul.f32 %v769, %v769
        %v818 = vmul.f32 %v774, %v774
        %v819 = vmul.f32 %v777, %v777
        %v820 = vmul.f32 %v782, %v782
        %v821 = vmul.f32 %v785, %v785
        %v822 = vmul.f32 %v790, %v790
        %v823 = vmul.f32 %v793, %v793
        %v824 = vmul.f32 %v798, %v798
        %v825 = vmul.f32 %v801, %v801
        %v826 = vmul.f32 %v806, %v806
        %v827 = vmul.f32 %v809, %v809
        %v828 = vmul.f32 %v750, %v812
        %v829 = vmul.f32 %v753, %v813
        %v830 = vmul.f32 %v758, %v814
        %v831 = vmul.f32 %v761, %v815
        %v832 = vmul.f32 %v766, %v816
        %v833 = vmul.f32 %v769, %v817
        %v834 = vmul.f32 %v774, %v818
        %v835 = vmul.f32 %v777, %v819
        %v836 = vmul.f32 %v782, %v820
        %v837 = vmul.f32 %v785, %v821
        %v838 = vmul.f32 %v790, %v822
        %v839 = vmul.f32 %v793, %v823
        %v840 = vmul.f32 %v798, %v824
        %v841 = vmul.f32 %v801, %v825
        %v842 = vmul.f32 %v806, %v826
        %v843 = vmul.f32 %v809, %v827
        %v844 = vmul.f32 %v828, 0.044715
        %v845 = vmul.f32 %v829, 0.044715
        %v846 = vmul.f32 %v830, 0.044715
        %v847 = vmul.f32 %v831, 0.044715
        %v848 = vmul.f32 %v832, 0.044715
        %v849 = vmul.f32 %v833, 0.044715
        %v850 = vmul.f32 %v834, 0.044715
        %v851 = vmul.f32 %v835, 0.044715
        %v852 = vmul.f32 %v836, 0.044715
        %v853 = vmul.f32 %v837, 0.044715
        %v854 = vmul.f32 %v838, 0.044715
        %v855 = vmul.f32 %v839, 0.044715
        %v856 = vmul.f32 %v840, 0.044715
        %v857 = vmul.f32 %v841, 0.044715
        %v858 = vmul.f32 %v842, 0.044715
        %v859 = vmul.f32 %v843, 0.044715
        %v860 = vadd.f32 %v750, %v844
        %v861 = vadd.f32 %v753, %v845
        %v862 = vadd.f32 %v758, %v846
        %v863 = vadd.f32 %v761, %v847
        %v864 = vadd.f32 %v766, %v848
        %v865 = vadd.f32 %v769, %v849
        %v866 = vadd.f32 %v774, %v850
        %v867 = vadd.f32 %v777, %v851
        %v868 = vadd.f32 %v782, %v852
        %v869 = vadd.f32 %v785, %v853
        %v870 = vadd.f32 %v790, %v854
        %v871 = vadd.f32 %v793, %v855
        %v872 = vadd.f32 %v798, %v856
        %v873 = vadd.f32 %v801, %v857
        %v874 = vadd.f32 %v806, %v858
        %v875 = vadd.f32 %v809, %v859
        %v876 = vmul.f32 %v860, 0.7978846
        %v877 = vmul.f32 %v861, 0.7978846
        %v878 = vmul.f32 %v862, 0.7978846
        %v879 = vmul.f32 %v863, 0.7978846
        %v880 = vmul.f32 %v864, 0.7978846
        %v881 = vmul.f32 %v865, 0.7978846
        %v882 = vmul.f32 %v866, 0.7978846
        %v883 = vmul.f32 %v867, 0.7978846
        %v884 = vmul.f32 %v868, 0.7978846
        %v885 = vmul.f32 %v869, 0.7978846
        %v886 = vmul.f32 %v870, 0.7978846
        %v887 = vmul.f32 %v871, 0.7978846
        %v888 = vmul.f32 %v872, 0.7978846
        %v889 = vmul.f32 %v873, 0.7978846
        %v890 = vmul.f32 %v874, 0.7978846
        %v891 = vmul.f32 %v875, 0.7978846
        %v892 = vtanh.pop %v876
        %v893 = vtanh.pop %v877
        %v894 = vtanh.pop %v878
        %v895 = vtanh.pop %v879
        %v896 = vtanh.pop %v880
        %v897 = vtanh.pop %v881
        %v898 = vtanh.pop %v882
        %v899 = vtanh.pop %v883
        %v900 = vtanh.pop %v884
        %v901 = vtanh.pop %v885
        %v902 = vtanh.pop %v886
        %v903 = vtanh.pop %v887
        %v904 = vtanh.pop %v888
        %v905 = vtanh.pop %v889
        %v906 = vtanh.pop %v890
        %v907 = vtanh.pop %v891
        %v908 = vadd.f32 %v892, 1.0
        %v909 = vadd.f32 %v893, 1.0
        %v910 = vadd.f32 %v894, 1.0
        %v911 = vadd.f32 %v895, 1.0
        %v912 = vadd.f32 %v896, 1.0
        %v913 = vadd.f32 %v897, 1.0
        %v914 = vadd.f32 %v898, 1.0
        %v915 = vadd.f32 %v899, 1.0
        %v916 = vadd.f32 %v900, 1.0
        %v917 = vadd.f32 %v901, 1.0
        %v918 = vadd.f32 %v902, 1.0
        %v919 = vadd.f32 %v903, 1.0
        %v920 = vadd.f32 %v904, 1.0
        %v921 = vadd.f32 %v905, 1.0
        %v922 = vadd.f32 %v906, 1.0
        %v923 = vadd.f32 %v907, 1.0
        %v924 = vmul.f32 %v908, 0.5
        %v925 = vmul.f32 %v909, 0.5
        %v926 = vmul.f32 %v910, 0.5
        %v927 = vmul.f32 %v911, 0.5
        %v928 = vmul.f32 %v912, 0.5
        %v929 = vmul.f32 %v913, 0.5
        %v930 = vmul.f32 %v914, 0.5
        %v931 = vmul.f32 %v915, 0.5
        %v932 = vmul.f32 %v916, 0.5
        %v933 = vmul.f32 %v917, 0.5
        %v934 = vmul.f32 %v918, 0.5
        %v935 = vmul.f32 %v919, 0.5
        %v936 = vmul.f32 %v920, 0.5
        %v937 = vmul.f32 %v921, 0.5
        %v938 = vmul.f32 %v922, 0.5
        %v939 = vmul.f32 %v923, 0.5
        %v940 = vmul.f32 %v750, %v924
        %v941 = vmul.f32 %v753, %v925
        %v942 = vmul.f32 %v758, %v926
        %v943 = vmul.f32 %v761, %v927
        %v944 = vmul.f32 %v766, %v928
        %v945 = vmul.f32 %v769, %v929
        %v946 = vmul.f32 %v774, %v930
        %v947 = vmul.f32 %v777, %v931
        %v948 = vmul.f32 %v782, %v932
        %v949 = vmul.f32 %v785, %v933
        %v950 = vmul.f32 %v790, %v934
        %v951 = vmul.f32 %v793, %v935
        %v952 = vmul.f32 %v798, %v936
        %v953 = vmul.f32 %v801, %v937
        %v954 = vmul.f32 %v806, %v938
        %v955 = vmul.f32 %v809, %v939
        %v956 = vld [vmem:[%s5] sm:$0x1]
        %v957 = vpack.c.bf16 %v941, %v940
        %v958 = vpack.c.bf16 %v943, %v942
        %v959 = vpack.c.bf16 %v945, %v944
        %v960 = vpack.c.bf16 %v947, %v946
        %v961 = vpack.c.bf16 %v949, %v948
        %v962 = vpack.c.bf16 %v951, %v950
        %v963 = vpack.c.bf16 %v953, %v952
        %v964 = vpack.c.bf16 %v955, %v954
        %965 = vmatprep.subr.bf16.mxu0 0
        %966 = vmatpush1.bf16.xpose.msra.mxu0 %v957
        %967 = vmatprep.subr.bf16.mxu0 0
        %968 = vmatpush1.bf16.xpose.msra.mxu0 %v958
        %969 = vmatprep.subr.bf16.mxu0 0
        %970 = vmatpush1.bf16.xpose.msra.mxu0 %v959
        %971 = vmatprep.subr.bf16.mxu0 0
        %972 = vmatpush1.bf16.xpose.msra.mxu0 %v960
        %973 = vmatprep.subr.bf16.mxu0 0
        %974 = vmatpush1.bf16.xpose.msra.mxu0 %v961
        %975 = vmatprep.subr.bf16.mxu0 0
        %976 = vmatpush1.bf16.xpose.msra.mxu0 %v962
        %977 = vmatprep.subr.bf16.mxu0 0
        %978 = vmatpush1.bf16.xpose.msra.mxu0 %v963
        %979 = vmatprep.subr.bf16.mxu0 0
        %980 = vmatpush1.bf16.xpose.msra.mxu0 %v964
        %981 = vmatprep.subr.bf16.mxu0 0
        %982 = vmatpush1.bf16.xpose.msra.mxu0 0
        %983 = vmatprep.subr.bf16.mxu0 0
        %984 = vmatpush1.bf16.xpose.msra.mxu0 0
        %985 = vmatprep.subr.bf16.mxu0 0
        %986 = vmatpush1.bf16.xpose.msra.mxu0 0
        %987 = vmatprep.subr.bf16.mxu0 0
        %988 = vmatpush1.bf16.xpose.msra.mxu0 0
        %989 = vmatprep.subr.bf16.mxu0 0
        %990 = vmatpush1.bf16.xpose.msra.mxu0 0
        %991 = vmatprep.subr.bf16.mxu0 0
        %992 = vmatpush1.bf16.xpose.msra.mxu0 0
        %993 = vmatprep.subr.bf16.mxu0 0
        %994 = vmatpush1.bf16.xpose.msra.mxu0 0
        %995 = vmatprep.subr.bf16.mxu0 0
        %996 = vmatpush1.bf16.xpose.msra.mxu0 0
        %997 = vmatprep.mubr.bf16.mxu0 0
        %998 = vmatmul.mubr.bf16.gmra.mrb[0].mxu0 %v956
        %v999 = vpop.f32.mrb[0].mxu0
        %v1000 = vadd.f32 0.0, %v999
        %v1001 = vpop.f32.mrb[0].mxu0
        %v1002 = vpop.f32.mrb[0].mxu0
        %v1003 = vpop.f32.mrb[0].mxu0
        %1004 = vdwg.mxu0
        %1005 = vst [vmem:[%s297] sm:$0x1] %v1000
        %s1006 = sand.u32 %s163, 1
        %s1007 = scalar_lea.sflag [#allocation4], %s1006
        %s1008 = sand.u32 %s163, 1
        %s1009 = scalar_lea.vmem [#allocation8], %s1008
        // Predicated region
        $region57: #{tpu_custom_call.1} parent=43 // pred_check
          %p1010 = pneg %p173
        $region58: #{tpu_custom_call.1} parent=43 // pred_check_branch
          %1012 = sbr.rel (%p1010) target = $region60
        $region59: #{tpu_custom_call.1} parent=43 // pred_region
          %s1014 = ssub.s32 16, 16
          %1015 = vsyncadd %s1007, %s1014
          %s1016 = smul.addr %s24, 16
          %s1017 = scalar_lea.hbm %s6, %s1016
          %s1019 = sshll.u32 %s1009, 4
          %s1020 = int_to_ptr.vmem [resolvable:$true] %s1019
          %1022 = dma.vmem_to_hbm [thread:$0]  %s1020, 16, %s1017, %s1007
        $region60: #{tpu_custom_call.1} parent=43 // pred_fallthru
          _
      $region44: #{tpu_custom_call.1} parent=5 // pred_fallthru
        _
      %p1023 = scmp.le.s32.totalorder 2, %s19
      // Predicated region
      $region61: #{tpu_custom_call.1} parent=5 // pred_check
        %p1024 = pneg %p1023
      $region62: #{tpu_custom_call.1} parent=5 // pred_check_branch
        %1026 = sbr.rel (%p1024) target = $region64
      $region63: #{tpu_custom_call.1} parent=5 // pred_region
        %s1027 = ssub.s32 %s19, 2
        // Predicated region
        $region65: #{tpu_custom_call.1} parent=63 // pred_check
          %p1028 = pneg %p179
        $region66: #{tpu_custom_call.1} parent=63 // pred_check_branch
          %1030 = sbr.rel (%p1028) target = $region68
        $region67: #{tpu_custom_call.1} parent=63 // pred_region
          %s1031 = sand.u32 %s164, 1
          %s1032 = scalar_lea.sflag [#allocation4], %s1031
          %s1033 = sand.u32 %s164, 1
          %s1034 = scalar_lea.vmem [#allocation8], %s1033
          %1035 = dma.done %s1032, 16
        $region68: #{tpu_custom_call.1} parent=63 // pred_fallthru
          _
      $region64: #{tpu_custom_call.1} parent=5 // pred_fallthru
        _
    $region6: #{tpu_custom_call.1} parent=1 // loop_footer
      %s23 = sadd.s32 1, %s19
    $region7: #{tpu_custom_call.1} parent=1 // loop_footer_branch
      %18 = sbr.rel target = $region3
    $region8: #{tpu_custom_call.1} parent=1 // loop_exit
      _
    %1036 = vsyncpa [#allocation3], 1
    %s1037 = scalar_lea.sflag [#allocation3], 1
    %1038 = vsyncpa %s1037, 1
    %1039 = vsyncpa [#allocation6], 1
    %1040 = vsyncpa [#allocation4], 1
    %s1041 = scalar_lea.sflag [#allocation4], 1
    %1042 = vsyncpa %s1041, 1

</llo_original>
